<compile_context>
chip_gen: v7x
topology: tpu7x:2x2x1
jax: 0.10.0
libtpu: 0.0.40
codegen_flags: <defaults>
</compile_context>

<pallas_src>
import jax
import jax.numpy as jnp
from jax.experimental import pallas as pl
from jax.experimental.pallas import tpu as pltpu


_MIN_STEPS = 8                      # target grid depth for pipelining
_MIN_STEP_IO_BYTES = 2 << 20        # don't shrink tiles below ~2 MiB of IO/step


def _make_kernel(bf16_math: bool):
    def kernel(x_ref, o_ref):
        # x_ref / o_ref: (block_batch, num_classes) VMEM tiles, caller dtype.
        x = x_ref[...]
        # Row max (exact in the native dtype).
        m = jnp.max(x, axis=1, keepdims=True)
        if bf16_math:
            # Narrow-precision path: keep the x - m subtract (cancellation
            # safe near the row max), all full-tile ops in bf16.
            xs = x - m
            y = jnp.maximum(xs * 0.5 + 1.0, 0.0)
        else:
            # f32 path: fold the shift into a per-row constant so the
            # full-tile work is mul+add+max:  y = max(0.5*x + (1 - 0.5*m), 0)
            # (identical to where(x-m < -2, 0, (x-m)*0.5 + 1) since x-m <= 0).
            xf = x.astype(jnp.float32)
            c = 1.0 - 0.5 * m.astype(jnp.float32)
            y = jnp.maximum(xf * 0.5 + c, 0.0)
        # Row sum accumulated in f32; s >= ~1 always (row max maps to ~1.0).
        s = jnp.sum(y, axis=1, keepdims=True, dtype=jnp.float32)
        # EUP reciprocal + one Newton-Raphson refinement (off the VPU divide).
        r = pl.reciprocal(s, approx=True)
        r = r * (2.0 - s * r)
        o_ref[...] = (y * r.astype(y.dtype)).astype(o_ref.dtype)

    return kernel


def _vmem_capacity_bytes() -> int:
    """Per-core VMEM capacity, 0 if it cannot be determined."""
    try:
        cap = getattr(pltpu.get_tpu_info(), "vmem_capacity_bytes", 0)
        if cap:
            return int(cap)
    except Exception:
        pass
    return 0


def _choose_block_batch(B: int, C: int, dtype_bytes: int, io_budget: int) -> int:
    """Batch tile size: as big as the streamed-IO budget allows, while keeping
    >= 2 grid steps (v7x megacore) and ideally >= _MIN_STEPS steps for the DMA
    pipeline, without dropping per-step IO below ~2 MiB."""
    row_io = 2 * C * dtype_bytes                       # in + out bytes per row
    tb_budget = max(1, io_budget // (2 * row_io))      # double-buffered tiles
    rows_2mib = max(1, _MIN_STEP_IO_BYTES // row_io)
    rows_for_steps = pl.cdiv(B, _MIN_STEPS)
    tb = min(tb_budget, max(rows_for_steps, rows_2mib))
    if B >= 16:
        tb = min(tb, pl.cdiv(B, 2))                    # always >= 2 grid steps
    tb = min(tb, B)
    if tb >= B:
        return B                                       # single full-dim tile
    return max(8, (tb // 8) * 8)                       # sublane multiple


def piranha_softmax(x: jax.Array, *, block_batch: int | None = None) -> jax.Array:
    """Pallas TPU implementation of Piranha_softmax.forward.

    x: [B, C] array; reduction is over axis 1 (C), matching torch dim=1.
    """
    assert x.ndim == 2, "expected [batch, num_classes] input"
    B, C = x.shape
    dtype_bytes = jnp.dtype(x.dtype).itemsize
    bf16_math = x.dtype == jnp.bfloat16
    compute_bytes = 2 if bf16_math else 4

    vmem_cap = _vmem_capacity_bytes()
    if vmem_cap <= 0:
        vmem_cap = 64 << 20                  # conservative: v7x-class per-core
    io_budget = (28 << 20) if vmem_cap >= (100 << 20) else (20 << 20)

    if block_batch is None:
        tb = _choose_block_batch(B, C, dtype_bytes, io_budget)
    else:
        tb = min(block_batch, B)
        if tb < B:
            tb = max(8, (tb // 8) * 8)       # keep the sublane constraint

    grid = (pl.cdiv(B, tb),)                 # partial tail block is fine:
                                             # rows are independent and OOB
                                             # writes are dropped by Pallas.

    # VMEM limit: double-buffered IO tiles + in-kernel temporaries + slack,
    # clamped to 3/4 of the physical per-core capacity.
    io_bytes = 4 * tb * C * dtype_bytes
    tmp_bytes = 3 * tb * C * compute_bytes
    vmem_limit = int(min(max(io_bytes + tmp_bytes + (4 << 20), 16 << 20),
                         (vmem_cap * 3) // 4))

    cost = pl.CostEstimate(
        flops=6 * B * C,
        transcendentals=0,
        bytes_accessed=2 * B * C * dtype_bytes,
    )

    return pl.pallas_call(
        _make_kernel(bf16_math),
        out_shape=jax.ShapeDtypeStruct((B, C), x.dtype),
        grid_spec=pltpu.PrefetchScalarGridSpec(
            num_scalar_prefetch=0,
            grid=grid,
            in_specs=[pl.BlockSpec((tb, C), lambda i: (i, 0))],
            out_specs=pl.BlockSpec((tb, C), lambda i: (i, 0)),
        ),
        compiler_params=pltpu.CompilerParams(
            dimension_semantics=("parallel",),   # shards batch tiles across TCs
            vmem_limit_bytes=vmem_limit,
        ),
        cost_estimate=cost,
    )(x)


def _reference(x: jax.Array) -> jax.Array:
    # Pure-JAX reference mirroring the PyTorch module (computed in f32).
    x = x.astype(jnp.float32)
    x = x - jnp.max(x, axis=1, keepdims=True)
    x = jnp.where(x < -2.0, 0.0, x * 0.5 + 1.0)
    return x / jnp.sum(x, axis=1, keepdims=True)


if __name__ == "__main__":
    key = jax.random.PRNGKey(0)
    k1, k2, k3, k4 = jax.random.split(key, 4)

    # 1) Small f32 logits-shaped input (single full-array tile).
    x1 = jax.random.normal(k1, (8, 128), dtype=jnp.float32) * 3.0
    out1 = jax.block_until_ready(piranha_softmax(x1))
    ref1 = _reference(x1)
    assert out1.shape == ref1.shape and out1.dtype == x1.dtype
    assert jnp.allclose(out1, ref1, atol=1e-5, rtol=1e-5), "f32 mismatch"

    # 2) Non-divisible batch with a forced small tile -> exercises the
    #    cdiv grid + partial tail-block path.
    x2 = jax.random.normal(k2, (24, 256), dtype=jnp.float32) * 2.0
    out2 = jax.block_until_ready(piranha_softmax(x2, block_batch=16))
    ref2 = _reference(x2)
    assert jnp.allclose(out2, ref2, atol=1e-5, rtol=1e-5), "tail-block mismatch"

    # 3) bf16 input: tiles stream in bf16, elementwise math in bf16,
    #    row sum accumulated in f32 inside the kernel.
    x3 = (jax.random.normal(k3, (16, 128), dtype=jnp.float32) * 3.0).astype(jnp.bfloat16)
    out3 = jax.block_until_ready(piranha_softmax(x3))
    assert out3.dtype == jnp.bfloat16
    ref3 = _reference(x3)
    assert jnp.allclose(out3.astype(jnp.float32), ref3, atol=1e-2, rtol=1e-2), "bf16 mismatch"

    # 4) Auto-tiled path with B large enough to force a multi-step grid
    #    (>= 2 steps; exercises the megacore/pipelining split).
    x4 = jax.random.normal(k4, (256, 128), dtype=jnp.float32) * 3.0
    out4 = jax.block_until_ready(piranha_softmax(x4))
    ref4 = _reference(x4)
    assert jnp.allclose(out4, ref4, atol=1e-5, rtol=1e-5), "multi-step mismatch"

    print("KERNEL_OK")
</pallas_src>

<mosaic_0001>
module attributes {stable_mosaic.version = 11 : i64} {
  func.func @kernel(%arg0: i32, %arg1: memref<8x128xf32, #tpu.memory_space<vmem>>, %arg2: memref<8x128xf32, #tpu.memory_space<vmem>>) attributes {dimension_semantics = [#tpu.dimension_semantics<parallel>], iteration_bounds = array<i64: 1>, scalar_prefetch = 0 : i64, scratch_operands = 0 : i64, tpu.core_type = #tpu.core_type<tc>, window_params = [{transform_indices = @transform_0, window_bounds = array<i64: 8, 128>}, {transform_indices = @transform_1, window_bounds = array<i64: 8, 128>}]} {
    %c0 = arith.constant 0 : index
    %c0_0 = arith.constant 0 : index
    %0 = vector.load %arg1[%c0, %c0_0] : memref<8x128xf32, #tpu.memory_space<vmem>>, vector<8x128xf32>
    %cst = arith.constant dense<0xFF800000> : vector<8xf32>
    %1 = vector.multi_reduction <maximumf>, %0, %cst [1] : vector<8x128xf32> to vector<8xf32>
    %2 = vector.shape_cast %1 : vector<8xf32> to vector<8x1xf32>
    %cst_1 = arith.constant 5.000000e-01 : f32
    %3 = vector.broadcast %cst_1 : f32 to vector<8x1xf32>
    %4 = arith.mulf %3, %2 : vector<8x1xf32>
    %cst_2 = arith.constant 1.000000e+00 : f32
    %5 = vector.broadcast %cst_2 : f32 to vector<8x1xf32>
    %6 = arith.subf %5, %4 : vector<8x1xf32>
    %cst_3 = arith.constant 5.000000e-01 : f32
    %7 = vector.broadcast %cst_3 : f32 to vector<8x128xf32>
    %8 = arith.mulf %0, %7 : vector<8x128xf32>
    %9 = vector.broadcast %6 : vector<8x1xf32> to vector<8x128xf32>
    %10 = arith.addf %8, %9 : vector<8x128xf32>
    %cst_4 = arith.constant 0.000000e+00 : f32
    %11 = vector.broadcast %cst_4 : f32 to vector<8x128xf32>
    %12 = arith.maximumf %10, %11 : vector<8x128xf32>
    %cst_5 = arith.constant dense<0.000000e+00> : vector<8xf32>
    %13 = vector.multi_reduction <add>, %12, %cst_5 [1] : vector<8x128xf32> to vector<8xf32>
    %14 = vector.shape_cast %13 : vector<8xf32> to vector<8x1xf32>
    %15 = tpu.reciprocal %14 {approx = true} : vector<8x1xf32> -> vector<8x1xf32>
    %16 = arith.mulf %14, %15 : vector<8x1xf32>
    %cst_6 = arith.constant 2.000000e+00 : f32
    %17 = vector.broadcast %cst_6 : f32 to vector<8x1xf32>
    %18 = arith.subf %17, %16 : vector<8x1xf32>
    %19 = arith.mulf %15, %18 : vector<8x1xf32>
    %20 = vector.broadcast %19 : vector<8x1xf32> to vector<8x128xf32>
    %21 = arith.mulf %12, %20 : vector<8x128xf32>
    %c0_7 = arith.constant 0 : index
    %c0_8 = arith.constant 0 : index
    %22 = vector.load %arg2[%c0_7, %c0_8] : memref<8x128xf32, #tpu.memory_space<vmem>>, vector<8x128xf32>
    tpu.vector_store %arg2[%c0_7, %c0_8], %21 {strides = array<i32>} : memref<8x128xf32, #tpu.memory_space<vmem>>, vector<8x128xf32>,
    return
  }
  func.func @transform_0(%arg0: i32) -> (i32, i32) {
    %c0_i32 = arith.constant 0 : i32
    %c0_i32_0 = arith.constant 0 : i32
    return %arg0, %c0_i32 : i32, i32
  }
  func.func @transform_1(%arg0: i32) -> (i32, i32) {
    %c0_i32 = arith.constant 0 : i32
    %c0_i32_0 = arith.constant 0 : i32
    return %arg0, %c0_i32 : i32, i32
  }
}

</mosaic_0001>

<llo_original>
// kernel: tpu_custom_call.1
$region0: #{tpu_custom_call.1}
  #allocation0 [shape = 'u32[]', space=smem, size = 0x4, offset = 0x4, fixed_abs, tag = 'smem constant byte address 0x4 - core index']
  #allocation1 [shape = 'u32[144,128]{1,0:T(1,128)}', space=vmem, size = 0x12000, scoped, tag = 'internal scratch']
  %s0 = inlined_call_operand.hbm [shape: f32[8,128], index: 0, kind: input, shape index: {}]
  %s1 = inlined_call_operand.hbm [shape: f32[8,128], index: 1, kind: output, shape index: {}]
  %s2 = sld [smem:[#allocation0]]
  $region18: #{tpu_custom_call.1} parent=0
    _
  %s4 = ssub.s32 1, %s2
  %s5 = scalar_select 0, %s4, %s2
  $region1: #{tpu_custom_call.1} parent=0
    #allocation2 [shape = 'u8[4096]{0}', space=vmem, size = 0x1000, scoped, tag = 'input window, operand 0, single buffered']
    #allocation3 [shape = 's32[1]{0}', space=sflag, size = 0x4, scoped, tag = 'scoped memory for tpu_custom_call.1']
    #allocation4 [shape = 's32[1]{0}', space=sflag, size = 0x4, scoped, tag = 'scoped memory for tpu_custom_call.1']
    #allocation5 [shape = 'u8[4096]{0}', space=vmem, size = 0x1000, scoped, tag = 'output window, operand 0, single buffered']
    %6 = vsyncpa [#allocation3], 0
    %7 = vsyncpa [#allocation4], 0
    // Predicated region
    $region2: #{tpu_custom_call.1} parent=1 // pred_check
      _
    $region3: #{tpu_custom_call.1} parent=1 // pred_check_branch
      %9 = sbr.rel (0) target = $region5
    $region4: #{tpu_custom_call.1} parent=1 // pred_region
      %s11 = ssub.s32 128, 128
      %12 = vsyncadd [#allocation3], %s11
      %s14 = sshll.u32 [#allocation2], 4
      %s15 = int_to_ptr.vmem [resolvable:$true] %s14
      %17 = dma.hbm_to_vmem [thread:$0]  %s0, 128, %s15, [#allocation3]
    $region5: #{tpu_custom_call.1} parent=1 // pred_fallthru
      _
    // Predicated region
    $region6: #{tpu_custom_call.1} parent=1 // pred_check
      _
    $region7: #{tpu_custom_call.1} parent=1 // pred_check_branch
      %19 = sbr.rel (0) target = $region9
    $region8: #{tpu_custom_call.1} parent=1 // pred_region
      %20 = dma.done [#allocation3], 128
    $region9: #{tpu_custom_call.1} parent=1 // pred_fallthru
      _
    %v21 = vld [vmem:[#allocation2] sm:$0xff]
    %22 = vmax.xlane.f32.xlu0 %v21
    %v23 = vpop.xlane.xlu0 %22
    %v24 = vmul.f32 %v23, 0.5
    %v25 = vsub.f32 1.0, %v24
    %v26 = vmul.f32 %v21, 0.5
    %v27 = vadd.f32 %v26, %v25
    %v28 = vmax.f32 %v27, 0.0
    %29 = vadd.xlane.f32.xlu0 %v28
    %v30 = vpop.xlane.xlu0 %29
    %v31 = vrcp.pop %v30
    %v32 = vmul.f32 %v30, %v31
    %v33 = vsub.f32 2.0, %v32
    %v34 = vmul.f32 %v31, %v33
    %v35 = vmul.f32 %v28, %v34
    %36 = vst [vmem:[#allocation5] sm:$0xff] %v35
    // Predicated region
    $region10: #{tpu_custom_call.1} parent=1 // pred_check
      _
    $region11: #{tpu_custom_call.1} parent=1 // pred_check_branch
      %38 = sbr.rel (0) target = $region13
    $region12: #{tpu_custom_call.1} parent=1 // pred_region
      %s40 = ssub.s32 128, 128
      %41 = vsyncadd [#allocation4], %s40
      %s43 = sshll.u32 [#allocation5], 4
      %s44 = int_to_ptr.vmem [resolvable:$true] %s43
      %46 = dma.vmem_to_hbm [thread:$0]  %s44, 128, %s1, [#allocation4]
    $region13: #{tpu_custom_call.1} parent=1 // pred_fallthru
      _
    // Predicated region
    $region14: #{tpu_custom_call.1} parent=1 // pred_check
      _
    $region15: #{tpu_custom_call.1} parent=1 // pred_check_branch
      %48 = sbr.rel (0) target = $region17
    $region16: #{tpu_custom_call.1} parent=1 // pred_region
      %49 = dma.done [#allocation4], 128
    $region17: #{tpu_custom_call.1} parent=1 // pred_fallthru
      _
    %50 = vsyncpa [#allocation3], 1
    %51 = vsyncpa [#allocation4], 1

</llo_original>
